<compile_context>
chip_gen: v5e
topology: v5e:2x2
jax: 0.10.0
libtpu: 0.0.40
codegen_flags: <defaults>
</compile_context>

<pallas_src>
import functools

import jax
import jax.numpy as jnp
from jax.experimental import pallas as pl
from jax.experimental.pallas import tpu as pltpu

LS = 50           # hidden width of the PyTorch module
HPAD = 128        # padded hidden width (sublane axis of the activations)
LANE = 128        # lane width / batch-tile granularity
MAX_TILE = 4096   # max batch columns per grid step


def _round_up(n, m):
    return ((n + m - 1) // m) * m


def _mlp_kernel(x_ref,
                w1_ref, b1_ref,
                w2_ref, b2_ref,
                w3_ref, b3_ref,
                w4_ref, b4_ref,
                w5_ref, b5_ref,
                o_ref):
    """One lane-dense (1, TM) batch tile through the 5-layer tanh MLP."""
    x = x_ref[...]                                           # (1, TM) f32

    # Layer 1 (in_features == 1): outer-product broadcast on the VPU.
    h = jnp.tanh(w1_ref[...] * x + b1_ref[...])              # (HPAD, TM) f32

    def dense_tanh(w_ref, b_ref, h):
        # bf16 operands on the MXU, f32 accumulation; elementwise stays f32.
        z = jnp.dot(w_ref[...], h.astype(jnp.bfloat16),
                    preferred_element_type=jnp.float32)      # (HPAD, TM) f32
        return jnp.tanh(z + b_ref[...])

    h = dense_tanh(w2_ref, b2_ref, h)
    h = dense_tanh(w3_ref, b3_ref, h)
    h = dense_tanh(w4_ref, b4_ref, h)

    # Layer 5 (out_features == 1): weighted sublane (XLU) reduction.
    out = jnp.sum(h * w5_ref[...], axis=0, keepdims=True) + b5_ref[...]
    o_ref[...] = out.astype(o_ref.dtype)                     # (1, TM) lane-dense


def prepare_params(params):
    """Pad the raw (in,out)-layout params ONCE into the kernel layout.

    Hidden-layer weights are stored TRANSPOSED (out, in) = W^T, zero-padded to
    (HPAD, HPAD) and cast to bf16; biases and the degenerate first/last layer
    weights are zero-padded f32 (HPAD, 1) columns."""
    def pad_col(v, rows):
        out = jnp.zeros((rows, 1), jnp.float32)
        return out.at[:v.shape[0], 0].set(v.astype(jnp.float32))

    def pad_wT(w, rows, cols, dtype):
        wt = w.astype(jnp.float32).T                     # (out, in)
        out = jnp.zeros((rows, cols), jnp.float32)
        out = out.at[:wt.shape[0], :wt.shape[1]].set(wt)
        return out.astype(dtype)

    pp = {
        "w1": pad_col(params["w1"][0, :], HPAD),         # W1^T column (HPAD, 1)
        "b1": pad_col(params["b1"], HPAD),
        "w2": pad_wT(params["w2"], HPAD, HPAD, jnp.bfloat16),
        "b2": pad_col(params["b2"], HPAD),
        "w3": pad_wT(params["w3"], HPAD, HPAD, jnp.bfloat16),
        "b3": pad_col(params["b3"], HPAD),
        "w4": pad_wT(params["w4"], HPAD, HPAD, jnp.bfloat16),
        "b4": pad_col(params["b4"], HPAD),
        "w5": pad_col(params["w5"][:, 0], HPAD),         # W5 column (HPAD, 1)
        "b5": params["b5"].reshape(1, 1).astype(jnp.float32),
    }
    return jax.tree_util.tree_map(jax.device_put, pp)


@functools.partial(jax.jit, static_argnames=("tm",))
def _forward_padded(x_row, pp, *, tm):
    n_pad = x_row.shape[1]
    grid = (n_pad // tm,)

    batch_spec = pl.BlockSpec((1, tm), lambda i: (0, i))        # streamed, lane-dense
    col = pl.BlockSpec((HPAD, 1), lambda i: (0, 0))             # VMEM-resident
    mat = pl.BlockSpec((HPAD, HPAD), lambda i: (0, 0))          # VMEM-resident
    scalar = pl.BlockSpec((1, 1), lambda i: (0, 0))

    in_specs = [
        batch_spec,            # x
        col, col,              # w1 col, b1
        mat, col,              # w2 (bf16), b2
        mat, col,              # w3 (bf16), b3
        mat, col,              # w4 (bf16), b4
        col, scalar,           # w5 col, b5
    ]

    return pl.pallas_call(
        _mlp_kernel,
        out_shape=jax.ShapeDtypeStruct((1, n_pad), jnp.float32),
        grid=grid,
        in_specs=in_specs,
        out_specs=pl.BlockSpec((1, tm), lambda i: (0, i)),
        compiler_params=pltpu.CompilerParams(
            dimension_semantics=("parallel",),
            vmem_limit_bytes=32 << 20,
        ),
    )(x_row,
      pp["w1"], pp["b1"],
      pp["w2"], pp["b2"],
      pp["w3"], pp["b3"],
      pp["w4"], pp["b4"],
      pp["w5"], pp["b5"])


def _choose_tile(n):
    """Batch-tile (multiple of LANE).  Nontrivial batches get >=2 grid steps
    so the 'parallel' axis shards across both v7x TensorCores."""
    n128 = _round_up(n, LANE)
    if n128 == LANE:
        return LANE
    return min(MAX_TILE, _round_up((n + 1) // 2, LANE))


def network_forward(x, padded_params):
    """x: (N, 1) float. padded_params: output of prepare_params()."""
    n = x.shape[0]
    tm = _choose_tile(n)
    n_pad = _round_up(n, tm)
    x_row = jnp.zeros((1, n_pad), jnp.float32).at[0, :n].set(
        x.astype(jnp.float32)[:, 0])
    out = _forward_padded(x_row, padded_params, tm=tm)
    return out[0, :n].reshape(n, 1)


def init_params(key):
    """PyTorch nn.Linear-style uniform(-1/sqrt(fan_in), 1/sqrt(fan_in)) init.

    Weights stored as (in_features, out_features) so the reference math is
    x @ W, matching PyTorch's x @ W.T with W of shape (out, in)."""
    dims = [(1, LS), (LS, LS), (LS, LS), (LS, LS), (LS, 1)]
    params = {}
    for i, (fin, fout) in enumerate(dims, start=1):
        key, kw, kb = jax.random.split(key, 3)
        bound = 1.0 / jnp.sqrt(jnp.float32(fin))
        params[f"w{i}"] = jax.random.uniform(kw, (fin, fout), jnp.float32,
                                             minval=-bound, maxval=bound)
        params[f"b{i}"] = jax.random.uniform(kb, (fout,), jnp.float32,
                                             minval=-bound, maxval=bound)
    return params


def _reference(x, params):
    h = x
    for i in range(1, 5):
        h = jnp.tanh(h @ params[f"w{i}"] + params[f"b{i}"])
    return h @ params["w5"] + params["b5"]


if __name__ == "__main__":
    key = jax.random.PRNGKey(0)
    key, kx1, kx2 = jax.random.split(key, 3)
    params = init_params(key)
    padded = prepare_params(params)

    # bf16 MXU operands -> compare against the f32 reference with ~1e-2 slack.
    ATOL, RTOL = 2e-2, 2e-2

    # Small batch, matching the (N, 1) scalar-input shape of the module.
    N1 = 8
    x1 = jax.random.uniform(kx1, (N1, 1), jnp.float32, minval=0.0, maxval=2.0)
    out1 = jax.block_until_ready(network_forward(x1, padded))
    ref1 = _reference(x1, params)
    assert out1.shape == (N1, 1)
    assert jnp.allclose(out1, ref1, atol=ATOL, rtol=RTOL), (
        float(jnp.max(jnp.abs(out1 - ref1))))

    # Larger batch to exercise a multi-step grid (both TCs on v7x) + padding.
    N2 = 2500
    x2 = jax.random.uniform(kx2, (N2, 1), jnp.float32, minval=0.0, maxval=2.0)
    out2 = jax.block_until_ready(network_forward(x2, padded))
    ref2 = _reference(x2, params)
    assert out2.shape == (N2, 1)
    assert jnp.allclose(out2, ref2, atol=ATOL, rtol=RTOL), (
        float(jnp.max(jnp.abs(out2 - ref2))))

    print("KERNEL_OK")
</pallas_src>

<mosaic_0001>
module attributes {stable_mosaic.version = 11 : i64} {
  func.func @_mlp_kernel(%arg0: i32, %arg1: memref<1x128xf32, #tpu.memory_space<vmem>>, %arg2: memref<128x1xf32, #tpu.memory_space<vmem>>, %arg3: memref<128x1xf32, #tpu.memory_space<vmem>>, %arg4: memref<128x128xbf16, #tpu.memory_space<vmem>>, %arg5: memref<128x1xf32, #tpu.memory_space<vmem>>, %arg6: memref<128x128xbf16, #tpu.memory_space<vmem>>, %arg7: memref<128x1xf32, #tpu.memory_space<vmem>>, %arg8: memref<128x128xbf16, #tpu.memory_space<vmem>>, %arg9: memref<128x1xf32, #tpu.memory_space<vmem>>, %arg10: memref<128x1xf32, #tpu.memory_space<vmem>>, %arg11: memref<1x1xf32, #tpu.memory_space<vmem>>, %arg12: memref<1x128xf32, #tpu.memory_space<vmem>>) attributes {dimension_semantics = [#tpu.dimension_semantics<parallel>], iteration_bounds = array<i64: 1>, scalar_prefetch = 0 : i64, scratch_operands = 0 : i64, tpu.core_type = #tpu.core_type<tc>, window_params = [{transform_indices = @transform_0, window_bounds = array<i64: 1, 128>}, {pipeline_mode = #tpu.pipeline_mode<synchronous>, transform_indices = @transform_1, window_bounds = array<i64: 128, 1>}, {pipeline_mode = #tpu.pipeline_mode<synchronous>, transform_indices = @transform_2, window_bounds = array<i64: 128, 1>}, {pipeline_mode = #tpu.pipeline_mode<synchronous>, transform_indices = @transform_3, window_bounds = array<i64: 128, 128>}, {pipeline_mode = #tpu.pipeline_mode<synchronous>, transform_indices = @transform_4, window_bounds = array<i64: 128, 1>}, {pipeline_mode = #tpu.pipeline_mode<synchronous>, transform_indices = @transform_5, window_bounds = array<i64: 128, 128>}, {pipeline_mode = #tpu.pipeline_mode<synchronous>, transform_indices = @transform_6, window_bounds = array<i64: 128, 1>}, {pipeline_mode = #tpu.pipeline_mode<synchronous>, transform_indices = @transform_7, window_bounds = array<i64: 128, 128>}, {pipeline_mode = #tpu.pipeline_mode<synchronous>, transform_indices = @transform_8, window_bounds = array<i64: 128, 1>}, {pipeline_mode = #tpu.pipeline_mode<synchronous>, transform_indices = @transform_9, window_bounds = array<i64: 128, 1>}, {pipeline_mode = #tpu.pipeline_mode<synchronous>, transform_indices = @transform_10, window_bounds = array<i64: 1, 1>}, {transform_indices = @transform_11, window_bounds = array<i64: 1, 128>}]} {
    %c0 = arith.constant 0 : index
    %c0_0 = arith.constant 0 : index
    %0 = vector.load %arg1[%c0, %c0_0] : memref<1x128xf32, #tpu.memory_space<vmem>>, vector<1x128xf32>
    %c0_1 = arith.constant 0 : index
    %c0_2 = arith.constant 0 : index
    %1 = vector.load %arg2[%c0_1, %c0_2] : memref<128x1xf32, #tpu.memory_space<vmem>>, vector<128x1xf32>
    %2 = vector.broadcast %1 : vector<128x1xf32> to vector<128x128xf32>
    %3 = vector.broadcast %0 : vector<1x128xf32> to vector<128x128xf32>
    %4 = arith.mulf %2, %3 : vector<128x128xf32>
    %c0_3 = arith.constant 0 : index
    %c0_4 = arith.constant 0 : index
    %5 = vector.load %arg3[%c0_3, %c0_4] : memref<128x1xf32, #tpu.memory_space<vmem>>, vector<128x1xf32>
    %6 = vector.broadcast %5 : vector<128x1xf32> to vector<128x128xf32>
    %7 = arith.addf %4, %6 : vector<128x128xf32>
    %8 = math.tanh %7 : vector<128x128xf32>
    %c0_5 = arith.constant 0 : index
    %c0_6 = arith.constant 0 : index
    %9 = vector.load %arg4[%c0_5, %c0_6] : memref<128x128xbf16, #tpu.memory_space<vmem>>, vector<128x128xbf16>
    %10 = arith.truncf %8 : vector<128x128xf32> to vector<128x128xbf16>
    %cst = arith.constant dense<0.000000e+00> : vector<128x128xf32>
    %11 = tpu.matmul %9, %10, %cst {dimension_numbers = #tpu.dot_dimension_numbers<[1], [0], [0], [1], [0, 0, 1, 1], [], []>} : vector<128x128xbf16>, vector<128x128xbf16>, vector<128x128xf32> -> vector<128x128xf32>
    %c0_7 = arith.constant 0 : index
    %c0_8 = arith.constant 0 : index
    %12 = vector.load %arg5[%c0_7, %c0_8] : memref<128x1xf32, #tpu.memory_space<vmem>>, vector<128x1xf32>
    %13 = vector.broadcast %12 : vector<128x1xf32> to vector<128x128xf32>
    %14 = arith.addf %11, %13 : vector<128x128xf32>
    %15 = math.tanh %14 : vector<128x128xf32>
    %c0_9 = arith.constant 0 : index
    %c0_10 = arith.constant 0 : index
    %16 = vector.load %arg6[%c0_9, %c0_10] : memref<128x128xbf16, #tpu.memory_space<vmem>>, vector<128x128xbf16>
    %17 = arith.truncf %15 : vector<128x128xf32> to vector<128x128xbf16>
    %cst_11 = arith.constant dense<0.000000e+00> : vector<128x128xf32>
    %18 = tpu.matmul %16, %17, %cst_11 {dimension_numbers = #tpu.dot_dimension_numbers<[1], [0], [0], [1], [0, 0, 1, 1], [], []>} : vector<128x128xbf16>, vector<128x128xbf16>, vector<128x128xf32> -> vector<128x128xf32>
    %c0_12 = arith.constant 0 : index
    %c0_13 = arith.constant 0 : index
    %19 = vector.load %arg7[%c0_12, %c0_13] : memref<128x1xf32, #tpu.memory_space<vmem>>, vector<128x1xf32>
    %20 = vector.broadcast %19 : vector<128x1xf32> to vector<128x128xf32>
    %21 = arith.addf %18, %20 : vector<128x128xf32>
    %22 = math.tanh %21 : vector<128x128xf32>
    %c0_14 = arith.constant 0 : index
    %c0_15 = arith.constant 0 : index
    %23 = vector.load %arg8[%c0_14, %c0_15] : memref<128x128xbf16, #tpu.memory_space<vmem>>, vector<128x128xbf16>
    %24 = arith.truncf %22 : vector<128x128xf32> to vector<128x128xbf16>
    %cst_16 = arith.constant dense<0.000000e+00> : vector<128x128xf32>
    %25 = tpu.matmul %23, %24, %cst_16 {dimension_numbers = #tpu.dot_dimension_numbers<[1], [0], [0], [1], [0, 0, 1, 1], [], []>} : vector<128x128xbf16>, vector<128x128xbf16>, vector<128x128xf32> -> vector<128x128xf32>
    %c0_17 = arith.constant 0 : index
    %c0_18 = arith.constant 0 : index
    %26 = vector.load %arg9[%c0_17, %c0_18] : memref<128x1xf32, #tpu.memory_space<vmem>>, vector<128x1xf32>
    %27 = vector.broadcast %26 : vector<128x1xf32> to vector<128x128xf32>
    %28 = arith.addf %25, %27 : vector<128x128xf32>
    %29 = math.tanh %28 : vector<128x128xf32>
    %c0_19 = arith.constant 0 : index
    %c0_20 = arith.constant 0 : index
    %30 = vector.load %arg10[%c0_19, %c0_20] : memref<128x1xf32, #tpu.memory_space<vmem>>, vector<128x1xf32>
    %31 = vector.broadcast %30 : vector<128x1xf32> to vector<128x128xf32>
    %32 = arith.mulf %29, %31 : vector<128x128xf32>
    %cst_21 = arith.constant dense<0.000000e+00> : vector<128xf32>
    %33 = vector.multi_reduction <add>, %32, %cst_21 [0] : vector<128x128xf32> to vector<128xf32>
    %34 = vector.shape_cast %33 : vector<128xf32> to vector<1x128xf32>
    %c0_22 = arith.constant 0 : index
    %c0_23 = arith.constant 0 : index
    %35 = vector.load %arg11[%c0_22, %c0_23] : memref<1x1xf32, #tpu.memory_space<vmem>>, vector<1x1xf32>
    %36 = vector.broadcast %35 : vector<1x1xf32> to vector<1x128xf32>
    %37 = arith.addf %34, %36 : vector<1x128xf32>
    %c0_24 = arith.constant 0 : index
    %c0_25 = arith.constant 0 : index
    %38 = vector.load %arg12[%c0_24, %c0_25] : memref<1x128xf32, #tpu.memory_space<vmem>>, vector<1x128xf32>
    tpu.vector_store %arg12[%c0_24, %c0_25], %37 {strides = array<i32>} : memref<1x128xf32, #tpu.memory_space<vmem>>, vector<1x128xf32>,
    return
  }
  func.func @transform_0(%arg0: i32) -> (i32, i32) {
    %c0_i32 = arith.constant 0 : i32
    %c0_i32_0 = arith.constant 0 : i32
    return %c0_i32, %arg0 : i32, i32
  }
  func.func @transform_1(%arg0: i32) -> (i32, i32) {
    %c0_i32 = arith.constant 0 : i32
    %c0_i32_0 = arith.constant 0 : i32
    %c0_i32_1 = arith.constant 0 : i32
    return %c0_i32, %c0_i32_0 : i32, i32
  }
  func.func @transform_2(%arg0: i32) -> (i32, i32) {
    %c0_i32 = arith.constant 0 : i32
    %c0_i32_0 = arith.constant 0 : i32
    %c0_i32_1 = arith.constant 0 : i32
    return %c0_i32, %c0_i32_0 : i32, i32
  }
  func.func @transform_3(%arg0: i32) -> (i32, i32) {
    %c0_i32 = arith.constant 0 : i32
    %c0_i32_0 = arith.constant 0 : i32
    %c0_i32_1 = arith.constant 0 : i32
    return %c0_i32, %c0_i32_0 : i32, i32
  }
  func.func @transform_4(%arg0: i32) -> (i32, i32) {
    %c0_i32 = arith.constant 0 : i32
    %c0_i32_0 = arith.constant 0 : i32
    %c0_i32_1 = arith.constant 0 : i32
    return %c0_i32, %c0_i32_0 : i32, i32
  }
  func.func @transform_5(%arg0: i32) -> (i32, i32) {
    %c0_i32 = arith.constant 0 : i32
    %c0_i32_0 = arith.constant 0 : i32
    %c0_i32_1 = arith.constant 0 : i32
    return %c0_i32, %c0_i32_0 : i32, i32
  }
  func.func @transform_6(%arg0: i32) -> (i32, i32) {
    %c0_i32 = arith.constant 0 : i32
    %c0_i32_0 = arith.constant 0 : i32
    %c0_i32_1 = arith.constant 0 : i32
    return %c0_i32, %c0_i32_0 : i32, i32
  }
  func.func @transform_7(%arg0: i32) -> (i32, i32) {
    %c0_i32 = arith.constant 0 : i32
    %c0_i32_0 = arith.constant 0 : i32
    %c0_i32_1 = arith.constant 0 : i32
    return %c0_i32, %c0_i32_0 : i32, i32
  }
  func.func @transform_8(%arg0: i32) -> (i32, i32) {
    %c0_i32 = arith.constant 0 : i32
    %c0_i32_0 = arith.constant 0 : i32
    %c0_i32_1 = arith.constant 0 : i32
    return %c0_i32, %c0_i32_0 : i32, i32
  }
  func.func @transform_9(%arg0: i32) -> (i32, i32) {
    %c0_i32 = arith.constant 0 : i32
    %c0_i32_0 = arith.constant 0 : i32
    %c0_i32_1 = arith.constant 0 : i32
    return %c0_i32, %c0_i32_0 : i32, i32
  }
  func.func @transform_10(%arg0: i32) -> (i32, i32) {
    %c0_i32 = arith.constant 0 : i32
    %c0_i32_0 = arith.constant 0 : i32
    %c0_i32_1 = arith.constant 0 : i32
    return %c0_i32, %c0_i32_0 : i32, i32
  }
  func.func @transform_11(%arg0: i32) -> (i32, i32) {
    %c0_i32 = arith.constant 0 : i32
    %c0_i32_0 = arith.constant 0 : i32
    return %c0_i32, %arg0 : i32, i32
  }
}

</mosaic_0001>

<llo_original>
// kernel: _forward_padded.1
$region0: #{_forward_padded.1}
  #allocation0 [shape = 'u32[]', space=smem, size = 0x4, offset = 0x4, fixed_abs, tag = 'smem constant byte address 0x4 - core index']
  #allocation1 [shape = 'u32[72,128]{1,0:T(1,128)}', space=vmem, size = 0x9000, scoped, tag = 'internal scratch']
  #allocation2 [shape = 'f32[1,1]{1,0:T(1,128)S(1)}', space=vmem, size = 0x200, scoped, tag = 'scoped memory for _forward_padded.1']
  %s0 = inlined_call_operand.vmem [shape: f32[1,128], index: 0, kind: input, shape index: {}]
  %s1 = inlined_call_operand.vmem [shape: f32[128,1], index: 1, kind: input, shape index: {}]
  %s2 = inlined_call_operand.vmem [shape: f32[128,1], index: 2, kind: input, shape index: {}]
  %s3 = inlined_call_operand.vmem [shape: bf16[128,128], index: 3, kind: input, shape index: {}]
  %s4 = inlined_call_operand.vmem [shape: f32[128,1], index: 4, kind: input, shape index: {}]
  %s5 = inlined_call_operand.vmem [shape: bf16[128,128], index: 5, kind: input, shape index: {}]
  %s6 = inlined_call_operand.vmem [shape: f32[128,1], index: 6, kind: input, shape index: {}]
  %s7 = inlined_call_operand.vmem [shape: bf16[128,128], index: 7, kind: input, shape index: {}]
  %s8 = inlined_call_operand.vmem [shape: f32[128,1], index: 8, kind: input, shape index: {}]
  %s9 = inlined_call_operand.vmem [shape: f32[128,1], index: 9, kind: input, shape index: {}]
  %s10 = inlined_call_operand.<no memory space> [shape: f32[1,1], index: 10, kind: input, shape index: {}]
  %s11 = inlined_call_operand.hbm [shape: f32[1,128], index: 11, kind: output, shape index: {}]
  %s12 = sld [smem:[#allocation0]]
  $region54: #{_forward_padded.1} parent=0
    _
  %s14 = ssub.s32 1, %s12
  %s15 = scalar_select 0, %s14, %s12
  %v16 = vstv %s10
  %17 = vst [vmem:[#allocation2] sm:$0x1] %v16
  $region1: #{_forward_padded.1} parent=0
    #allocation3 [shape = 'u8[512]{0}', space=vmem, size = 0x400, scoped, tag = 'output window, operand 0, single buffered']
    #allocation4 [shape = 's32[1]{0}', space=sflag, size = 0x4, scoped, tag = 'scoped memory for _forward_padded.1']
    %18 = vsyncpa [#allocation4], 0
    // Predicated region
    $region2: #{_forward_padded.1} parent=1 // pred_check
      _
    $region3: #{_forward_padded.1} parent=1 // pred_check_branch
      %20 = sbr.rel (0) target = $region5
    $region4: #{_forward_padded.1} parent=1 // pred_region
      _
    $region5: #{_forward_padded.1} parent=1 // pred_fallthru
      _
    // Predicated region
    $region6: #{_forward_padded.1} parent=1 // pred_check
      _
    $region7: #{_forward_padded.1} parent=1 // pred_check_branch
      %22 = sbr.rel (0) target = $region9
    $region8: #{_forward_padded.1} parent=1 // pred_region
      _
    $region9: #{_forward_padded.1} parent=1 // pred_fallthru
      _
    // Predicated region
    $region10: #{_forward_padded.1} parent=1 // pred_check
      _
    $region11: #{_forward_padded.1} parent=1 // pred_check_branch
      %24 = sbr.rel (0) target = $region13
    $region12: #{_forward_padded.1} parent=1 // pred_region
      _
    $region13: #{_forward_padded.1} parent=1 // pred_fallthru
      _
    // Predicated region
    $region14: #{_forward_padded.1} parent=1 // pred_check
      _
    $region15: #{_forward_padded.1} parent=1 // pred_check_branch
      %26 = sbr.rel (0) target = $region17
    $region16: #{_forward_padded.1} parent=1 // pred_region
      _
    $region17: #{_forward_padded.1} parent=1 // pred_fallthru
      _
    // Predicated region
    $region18: #{_forward_padded.1} parent=1 // pred_check
      _
    $region19: #{_forward_padded.1} parent=1 // pred_check_branch
      %28 = sbr.rel (0) target = $region21
    $region20: #{_forward_padded.1} parent=1 // pred_region
      _
    $region21: #{_forward_padded.1} parent=1 // pred_fallthru
      _
    // Predicated region
    $region22: #{_forward_padded.1} parent=1 // pred_check
      _
    $region23: #{_forward_padded.1} parent=1 // pred_check_branch
      %30 = sbr.rel (0) target = $region25
    $region24: #{_forward_padded.1} parent=1 // pred_region
      _
    $region25: #{_forward_padded.1} parent=1 // pred_fallthru
      _
    // Predicated region
    $region26: #{_forward_padded.1} parent=1 // pred_check
      _
    $region27: #{_forward_padded.1} parent=1 // pred_check_branch
      %32 = sbr.rel (0) target = $region29
    $region28: #{_forward_padded.1} parent=1 // pred_region
      _
    $region29: #{_forward_padded.1} parent=1 // pred_fallthru
      _
    // Predicated region
    $region30: #{_forward_padded.1} parent=1 // pred_check
      _
    $region31: #{_forward_padded.1} parent=1 // pred_check_branch
      %34 = sbr.rel (0) target = $region33
    $region32: #{_forward_padded.1} parent=1 // pred_region
      _
    $region33: #{_forward_padded.1} parent=1 // pred_fallthru
      _
    // Predicated region
    $region34: #{_forward_padded.1} parent=1 // pred_check
      _
    $region35: #{_forward_padded.1} parent=1 // pred_check_branch
      %36 = sbr.rel (0) target = $region37
    $region36: #{_forward_padded.1} parent=1 // pred_region
      _
    $region37: #{_forward_padded.1} parent=1 // pred_fallthru
      _
    // Predicated region
    $region38: #{_forward_padded.1} parent=1 // pred_check
      _
    $region39: #{_forward_padded.1} parent=1 // pred_check_branch
      %38 = sbr.rel (0) target = $region41
    $region40: #{_forward_padded.1} parent=1 // pred_region
      _
    $region41: #{_forward_padded.1} parent=1 // pred_fallthru
      _
    // Predicated region
    $region42: #{_forward_padded.1} parent=1 // pred_check
      _
    $region43: #{_forward_padded.1} parent=1 // pred_check_branch
      %40 = sbr.rel (0) target = $region45
    $region44: #{_forward_padded.1} parent=1 // pred_region
      _
    $region45: #{_forward_padded.1} parent=1 // pred_fallthru
      _
    %v41 = vld [vmem:[%s0] sm:$0x1]
    %v42 = vld [vmem:[%s1] sm:$0xff]
    %v43 = vld [vmem:[%s1 + $0x8] sm:$0xff]
    %v44 = vld [vmem:[%s1 + $0x10] sm:$0xff]
    %v45 = vld [vmem:[%s1 + $0x18] sm:$0xff]
    %v46 = vld [vmem:[%s1 + $0x20] sm:$0xff]
    %v47 = vld [vmem:[%s1 + $0x28] sm:$0xff]
    %v48 = vld [vmem:[%s1 + $0x30] sm:$0xff]
    %v49 = vld [vmem:[%s1 + $0x38] sm:$0xff]
    %v50 = vld [vmem:[%s1 + $0x40] sm:$0xff]
    %v51 = vld [vmem:[%s1 + $0x48] sm:$0xff]
    %v52 = vld [vmem:[%s1 + $0x50] sm:$0xff]
    %v53 = vld [vmem:[%s1 + $0x58] sm:$0xff]
    %v54 = vld [vmem:[%s1 + $0x60] sm:$0xff]
    %v55 = vld [vmem:[%s1 + $0x68] sm:$0xff]
    %v56 = vld [vmem:[%s1 + $0x70] sm:$0xff]
    %v57 = vld [vmem:[%s1 + $0x78] sm:$0xff]
    %59 = vset.pattern.permute.xlu0 0
    %60 = vperm.xlu0 %59, %v42
    %v61 = vpop.permute.xlu0 %60
    %64 = vset.pattern.permute.xlu0 0
    %65 = vperm.xlu0 %64, %v43
    %v66 = vpop.permute.xlu0 %65
    %69 = vset.pattern.permute.xlu0 0
    %70 = vperm.xlu0 %69, %v44
    %v71 = vpop.permute.xlu0 %70
    %74 = vset.pattern.permute.xlu0 0
    %75 = vperm.xlu0 %74, %v45
    %v76 = vpop.permute.xlu0 %75
    %79 = vset.pattern.permute.xlu0 0
    %80 = vperm.xlu0 %79, %v46
    %v81 = vpop.permute.xlu0 %80
    %84 = vset.pattern.permute.xlu0 0
    %85 = vperm.xlu0 %84, %v47
    %v86 = vpop.permute.xlu0 %85
    %89 = vset.pattern.permute.xlu0 0
    %90 = vperm.xlu0 %89, %v48
    %v91 = vpop.permute.xlu0 %90
    %94 = vset.pattern.permute.xlu0 0
    %95 = vperm.xlu0 %94, %v49
    %v96 = vpop.permute.xlu0 %95
    %99 = vset.pattern.permute.xlu0 0
    %100 = vperm.xlu0 %99, %v50
    %v101 = vpop.permute.xlu0 %100
    %104 = vset.pattern.permute.xlu0 0
    %105 = vperm.xlu0 %104, %v51
    %v106 = vpop.permute.xlu0 %105
    %109 = vset.pattern.permute.xlu0 0
    %110 = vperm.xlu0 %109, %v52
    %v111 = vpop.permute.xlu0 %110
    %114 = vset.pattern.permute.xlu0 0
    %115 = vperm.xlu0 %114, %v53
    %v116 = vpop.permute.xlu0 %115
    %119 = vset.pattern.permute.xlu0 0
    %120 = vperm.xlu0 %119, %v54
    %v121 = vpop.permute.xlu0 %120
    %124 = vset.pattern.permute.xlu0 0
    %125 = vperm.xlu0 %124, %v55
    %v126 = vpop.permute.xlu0 %125
    %129 = vset.pattern.permute.xlu0 0
    %130 = vperm.xlu0 %129, %v56
    %v131 = vpop.permute.xlu0 %130
    %134 = vset.pattern.permute.xlu0 0
    %135 = vperm.xlu0 %134, %v57
    %v136 = vpop.permute.xlu0 %135
    %v139 = vperm.slane %v41, 0
    %v141 = vmul.f32 %v61, %v139
    %v142 = vmul.f32 %v66, %v139
    %v143 = vmul.f32 %v71, %v139
    %v144 = vmul.f32 %v76, %v139
    %v145 = vmul.f32 %v81, %v139
    %v146 = vmul.f32 %v86, %v139
    %v147 = vmul.f32 %v91, %v139
    %v148 = vmul.f32 %v96, %v139
    %v149 = vmul.f32 %v101, %v139
    %v150 = vmul.f32 %v106, %v139
    %v151 = vmul.f32 %v111, %v139
    %v152 = vmul.f32 %v116, %v139
    %v153 = vmul.f32 %v121, %v139
    %v154 = vmul.f32 %v126, %v139
    %v155 = vmul.f32 %v131, %v139
    %v156 = vmul.f32 %v136, %v139
    %v157 = vld [vmem:[%s2] sm:$0xff]
    %v158 = vld [vmem:[%s2 + $0x8] sm:$0xff]
    %v159 = vld [vmem:[%s2 + $0x10] sm:$0xff]
    %v160 = vld [vmem:[%s2 + $0x18] sm:$0xff]
    %v161 = vld [vmem:[%s2 + $0x20] sm:$0xff]
    %v162 = vld [vmem:[%s2 + $0x28] sm:$0xff]
    %v163 = vld [vmem:[%s2 + $0x30] sm:$0xff]
    %v164 = vld [vmem:[%s2 + $0x38] sm:$0xff]
    %v165 = vld [vmem:[%s2 + $0x40] sm:$0xff]
    %v166 = vld [vmem:[%s2 + $0x48] sm:$0xff]
    %v167 = vld [vmem:[%s2 + $0x50] sm:$0xff]
    %v168 = vld [vmem:[%s2 + $0x58] sm:$0xff]
    %v169 = vld [vmem:[%s2 + $0x60] sm:$0xff]
    %v170 = vld [vmem:[%s2 + $0x68] sm:$0xff]
    %v171 = vld [vmem:[%s2 + $0x70] sm:$0xff]
    %v172 = vld [vmem:[%s2 + $0x78] sm:$0xff]
    %174 = vset.pattern.permute.xlu0 0
    %175 = vperm.xlu0 %174, %v157
    %v176 = vpop.permute.xlu0 %175
    %179 = vset.pattern.permute.xlu0 0
    %180 = vperm.xlu0 %179, %v158
    %v181 = vpop.permute.xlu0 %180
    %184 = vset.pattern.permute.xlu0 0
    %185 = vperm.xlu0 %184, %v159
    %v186 = vpop.permute.xlu0 %185
    %189 = vset.pattern.permute.xlu0 0
    %190 = vperm.xlu0 %189, %v160
    %v191 = vpop.permute.xlu0 %190
    %194 = vset.pattern.permute.xlu0 0
    %195 = vperm.xlu0 %194, %v161
    %v196 = vpop.permute.xlu0 %195
    %199 = vset.pattern.permute.xlu0 0
    %200 = vperm.xlu0 %199, %v162
    %v201 = vpop.permute.xlu0 %200
    %204 = vset.pattern.permute.xlu0 0
    %205 = vperm.xlu0 %204, %v163
    %v206 = vpop.permute.xlu0 %205
    %209 = vset.pattern.permute.xlu0 0
    %210 = vperm.xlu0 %209, %v164
    %v211 = vpop.permute.xlu0 %210
    %214 = vset.pattern.permute.xlu0 0
    %215 = vperm.xlu0 %214, %v165
    %v216 = vpop.permute.xlu0 %215
    %219 = vset.pattern.permute.xlu0 0
    %220 = vperm.xlu0 %219, %v166
    %v221 = vpop.permute.xlu0 %220
    %224 = vset.pattern.permute.xlu0 0
    %225 = vperm.xlu0 %224, %v167
    %v226 = vpop.permute.xlu0 %225
    %229 = vset.pattern.permute.xlu0 0
    %230 = vperm.xlu0 %229, %v168
    %v231 = vpop.permute.xlu0 %230
    %234 = vset.pattern.permute.xlu0 0
    %235 = vperm.xlu0 %234, %v169
    %v236 = vpop.permute.xlu0 %235
    %239 = vset.pattern.permute.xlu0 0
    %240 = vperm.xlu0 %239, %v170
    %v241 = vpop.permute.xlu0 %240
    %244 = vset.pattern.permute.xlu0 0
    %245 = vperm.xlu0 %244, %v171
    %v246 = vpop.permute.xlu0 %245
    %249 = vset.pattern.permute.xlu0 0
    %250 = vperm.xlu0 %249, %v172
    %v251 = vpop.permute.xlu0 %250
    %v253 = vadd.f32 %v141, %v176
    %v254 = vadd.f32 %v142, %v181
    %v255 = vadd.f32 %v143, %v186
    %v256 = vadd.f32 %v144, %v191
    %v257 = vadd.f32 %v145, %v196
    %v258 = vadd.f32 %v146, %v201
    %v259 = vadd.f32 %v147, %v206
    %v260 = vadd.f32 %v148, %v211
    %v261 = vadd.f32 %v149, %v216
    %v262 = vadd.f32 %v150, %v221
    %v263 = vadd.f32 %v151, %v226
    %v264 = vadd.f32 %v152, %v231
    %v265 = vadd.f32 %v153, %v236
    %v266 = vadd.f32 %v154, %v241
    %v267 = vadd.f32 %v155, %v246
    %v268 = vadd.f32 %v156, %v251
    %v269 = vtanh.pop %v253
    %v270 = vtanh.pop %v254
    %v271 = vtanh.pop %v255
    %v272 = vtanh.pop %v256
    %v273 = vtanh.pop %v257
    %v274 = vtanh.pop %v258
    %v275 = vtanh.pop %v259
    %v276 = vtanh.pop %v260
    %v277 = vtanh.pop %v261
    %v278 = vtanh.pop %v262
    %v279 = vtanh.pop %v263
    %v280 = vtanh.pop %v264
    %v281 = vtanh.pop %v265
    %v282 = vtanh.pop %v266
    %v283 = vtanh.pop %v267
    %v284 = vtanh.pop %v268
    %v285 = vld [vmem:[%s3] sm:$0xf]
    %v286 = vld [vmem:[%s3 + $0x4] sm:$0xf]
    %v287 = vld [vmem:[%s3 + $0x8] sm:$0xf]
    %v288 = vld [vmem:[%s3 + $0xc] sm:$0xf]
    %v289 = vld [vmem:[%s3 + $0x10] sm:$0xf]
    %v290 = vld [vmem:[%s3 + $0x14] sm:$0xf]
    %v291 = vld [vmem:[%s3 + $0x18] sm:$0xf]
    %v292 = vld [vmem:[%s3 + $0x1c] sm:$0xf]
    %v293 = vld [vmem:[%s3 + $0x20] sm:$0xf]
    %v294 = vld [vmem:[%s3 + $0x24] sm:$0xf]
    %v295 = vld [vmem:[%s3 + $0x28] sm:$0xf]
    %v296 = vld [vmem:[%s3 + $0x2c] sm:$0xf]
    %v297 = vld [vmem:[%s3 + $0x30] sm:$0xf]
    %v298 = vld [vmem:[%s3 + $0x34] sm:$0xf]
    %v299 = vld [vmem:[%s3 + $0x38] sm:$0xf]
    %v300 = vld [vmem:[%s3 + $0x3c] sm:$0xf]
    %v301 = vpack.c.bf16 %v270, %v269
    %v302 = vpack.c.bf16 %v272, %v271
    %v303 = vpack.c.bf16 %v274, %v273
    %v304 = vpack.c.bf16 %v276, %v275
    %v305 = vpack.c.bf16 %v278, %v277
    %v306 = vpack.c.bf16 %v280, %v279
    %v307 = vpack.c.bf16 %v282, %v281
    %v308 = vpack.c.bf16 %v284, %v283
    %v309 = vld [vmem:[%s4] sm:$0xff]
    %v310 = vld [vmem:[%s4 + $0x8] sm:$0xff]
    %v311 = vld [vmem:[%s4 + $0x10] sm:$0xff]
    %v312 = vld [vmem:[%s4 + $0x18] sm:$0xff]
    %v313 = vld [vmem:[%s4 + $0x20] sm:$0xff]
    %v314 = vld [vmem:[%s4 + $0x28] sm:$0xff]
    %v315 = vld [vmem:[%s4 + $0x30] sm:$0xff]
    %v316 = vld [vmem:[%s4 + $0x38] sm:$0xff]
    %v317 = vld [vmem:[%s4 + $0x40] sm:$0xff]
    %v318 = vld [vmem:[%s4 + $0x48] sm:$0xff]
    %v319 = vld [vmem:[%s4 + $0x50] sm:$0xff]
    %v320 = vld [vmem:[%s4 + $0x58] sm:$0xff]
    %v321 = vld [vmem:[%s4 + $0x60] sm:$0xff]
    %v322 = vld [vmem:[%s4 + $0x68] sm:$0xff]
    %v323 = vld [vmem:[%s4 + $0x70] sm:$0xff]
    %v324 = vld [vmem:[%s4 + $0x78] sm:$0xff]
    %326 = vset.pattern.permute.xlu0 0
    %327 = vperm.xlu0 %326, %v309
    %v328 = vpop.permute.xlu0 %327
    %331 = vset.pattern.permute.xlu0 0
    %332 = vperm.xlu0 %331, %v310
    %v333 = vpop.permute.xlu0 %332
    %336 = vset.pattern.permute.xlu0 0
    %337 = vperm.xlu0 %336, %v311
    %v338 = vpop.permute.xlu0 %337
    %341 = vset.pattern.permute.xlu0 0
    %342 = vperm.xlu0 %341, %v312
    %v343 = vpop.permute.xlu0 %342
    %346 = vset.pattern.permute.xlu0 0
    %347 = vperm.xlu0 %346, %v313
    %v348 = vpop.permute.xlu0 %347
    %351 = vset.pattern.permute.xlu0 0
    %352 = vperm.xlu0 %351, %v314
    %v353 = vpop.permute.xlu0 %352
    %356 = vset.pattern.permute.xlu0 0
    %357 = vperm.xlu0 %356, %v315
    %v358 = vpop.permute.xlu0 %357
    %361 = vset.pattern.permute.xlu0 0
    %362 = vperm.xlu0 %361, %v316
    %v363 = vpop.permute.xlu0 %362
    %366 = vset.pattern.permute.xlu0 0
    %367 = vperm.xlu0 %366, %v317
    %v368 = vpop.permute.xlu0 %367
    %371 = vset.pattern.permute.xlu0 0
    %372 = vperm.xlu0 %371, %v318
    %v373 = vpop.permute.xlu0 %372
    %376 = vset.pattern.permute.xlu0 0
    %377 = vperm.xlu0 %376, %v319
    %v378 = vpop.permute.xlu0 %377
    %381 = vset.pattern.permute.xlu0 0
    %382 = vperm.xlu0 %381, %v320
    %v383 = vpop.permute.xlu0 %382
    %386 = vset.pattern.permute.xlu0 0
    %387 = vperm.xlu0 %386, %v321
    %v388 = vpop.permute.xlu0 %387
    %391 = vset.pattern.permute.xlu0 0
    %392 = vperm.xlu0 %391, %v322
    %v393 = vpop.permute.xlu0 %392
    %396 = vset.pattern.permute.xlu0 0
    %397 = vperm.xlu0 %396, %v323
    %v398 = vpop.permute.xlu0 %397
    %401 = vset.pattern.permute.xlu0 0
    %402 = vperm.xlu0 %401, %v324
    %v403 = vpop.permute.xlu0 %402
    %v421 = vunpack.c.l.b16 %v285
    %v422 = vunpack.c.l.b16 %v286
    %v423 = vunpack.c.l.b16 %v287
    %v424 = vunpack.c.l.b16 %v288
    %v425 = vunpack.c.l.b16 %v289
    %v426 = vunpack.c.l.b16 %v290
    %v427 = vunpack.c.l.b16 %v291
    %v428 = vunpack.c.l.b16 %v292
    %v429 = vunpack.c.l.b16 %v293
    %v430 = vunpack.c.l.b16 %v294
    %v431 = vunpack.c.l.b16 %v295
    %v432 = vunpack.c.l.b16 %v296
    %v433 = vunpack.c.l.b16 %v297
    %v434 = vunpack.c.l.b16 %v298
    %v435 = vunpack.c.l.b16 %v299
    %v436 = vunpack.c.l.b16 %v300
    %v437 = vpack.c.b16 %v422, %v421
    %v438 = vpack.c.b16 %v424, %v423
    %v439 = vpack.c.b16 %v426, %v425
    %v440 = vpack.c.b16 %v428, %v427
    %v441 = vpack.c.b16 %v430, %v429
    %v442 = vpack.c.b16 %v432, %v431
    %v443 = vpack.c.b16 %v434, %v433
    %v444 = vpack.c.b16 %v436, %v435
    %453 = vmatpush.bf16.msra.mxu0 %v308
    %454 = vmatpush.bf16.msra.mxu0 %v307
    %455 = vmatpush.bf16.msra.mxu0 %v306
    %456 = vmatpush.bf16.msra.mxu0 %v305
    %457 = vmatpush.bf16.msra.mxu0 %v304
    %458 = vmatpush.bf16.msra.mxu0 %v303
    %459 = vmatpush.bf16.msra.mxu0 %v302
    %460 = vmatpush.bf16.msra.mxu0 %v301
    %461 = vmatmul.bf16.gmra.mxu0 %v437
    %v462 = vpop.f32.mrf.mxu0
    %v463 = vadd.f32 %v328, %v462
    %v464 = vpop.f32.mrf.mxu0
    %v465 = vadd.f32 %v333, %v464
    %466 = vmatmul.bf16.gmra.mxu0 %v438
    %v467 = vpop.f32.mrf.mxu0
    %v468 = vadd.f32 %v338, %v467
    %v469 = vpop.f32.mrf.mxu0
    %v470 = vadd.f32 %v343, %v469
    %471 = vmatmul.bf16.gmra.mxu0 %v439
    %v472 = vpop.f32.mrf.mxu0
    %v473 = vadd.f32 %v348, %v472
    %v474 = vpop.f32.mrf.mxu0
    %v475 = vadd.f32 %v353, %v474
    %476 = vmatmul.bf16.gmra.mxu0 %v440
    %v477 = vpop.f32.mrf.mxu0
    %v478 = vadd.f32 %v358, %v477
    %v479 = vpop.f32.mrf.mxu0
    %v480 = vadd.f32 %v363, %v479
    %481 = vmatmul.bf16.gmra.mxu0 %v441
    %v482 = vpop.f32.mrf.mxu0
    %v483 = vadd.f32 %v368, %v482
    %v484 = vpop.f32.mrf.mxu0
    %v485 = vadd.f32 %v373, %v484
    %486 = vmatmul.bf16.gmra.mxu0 %v442
    %v487 = vpop.f32.mrf.mxu0
    %v488 = vadd.f32 %v378, %v487
    %v489 = vpop.f32.mrf.mxu0
    %v490 = vadd.f32 %v383, %v489
    %491 = vmatmul.bf16.gmra.mxu0 %v443
    %v492 = vpop.f32.mrf.mxu0
    %v493 = vadd.f32 %v388, %v492
    %v494 = vpop.f32.mrf.mxu0
    %v495 = vadd.f32 %v393, %v494
    %496 = vmatmul.bf16.gmra.mxu0 %v444
    %v497 = vpop.f32.mrf.mxu0
    %v498 = vadd.f32 %v398, %v497
    %v499 = vpop.f32.mrf.mxu0
    %v500 = vadd.f32 %v403, %v499
    %501 = vdwg.mxu0
    %v502 = vtanh.pop %v463
    %v503 = vtanh.pop %v465
    %v504 = vtanh.pop %v468
    %v505 = vtanh.pop %v470
    %v506 = vtanh.pop %v473
    %v507 = vtanh.pop %v475
    %v508 = vtanh.pop %v478
    %v509 = vtanh.pop %v480
    %v510 = vtanh.pop %v483
    %v511 = vtanh.pop %v485
    %v512 = vtanh.pop %v488
    %v513 = vtanh.pop %v490
    %v514 = vtanh.pop %v493
    %v515 = vtanh.pop %v495
    %v516 = vtanh.pop %v498
    %v517 = vtanh.pop %v500
    %v518 = vld [vmem:[%s5] sm:$0xf]
    %v519 = vld [vmem:[%s5 + $0x4] sm:$0xf]
    %v520 = vld [vmem:[%s5 + $0x8] sm:$0xf]
    %v521 = vld [vmem:[%s5 + $0xc] sm:$0xf]
    %v522 = vld [vmem:[%s5 + $0x10] sm:$0xf]
    %v523 = vld [vmem:[%s5 + $0x14] sm:$0xf]
    %v524 = vld [vmem:[%s5 + $0x18] sm:$0xf]
    %v525 = vld [vmem:[%s5 + $0x1c] sm:$0xf]
    %v526 = vld [vmem:[%s5 + $0x20] sm:$0xf]
    %v527 = vld [vmem:[%s5 + $0x24] sm:$0xf]
    %v528 = vld [vmem:[%s5 + $0x28] sm:$0xf]
    %v529 = vld [vmem:[%s5 + $0x2c] sm:$0xf]
    %v530 = vld [vmem:[%s5 + $0x30] sm:$0xf]
    %v531 = vld [vmem:[%s5 + $0x34] sm:$0xf]
    %v532 = vld [vmem:[%s5 + $0x38] sm:$0xf]
    %v533 = vld [vmem:[%s5 + $0x3c] sm:$0xf]
    %v534 = vpack.c.bf16 %v503, %v502
    %v535 = vpack.c.bf16 %v505, %v504
    %v536 = vpack.c.bf16 %v507, %v506
    %v537 = vpack.c.bf16 %v509, %v508
    %v538 = vpack.c.bf16 %v511, %v510
    %v539 = vpack.c.bf16 %v513, %v512
    %v540 = vpack.c.bf16 %v515, %v514
    %v541 = vpack.c.bf16 %v517, %v516
    %v542 = vld [vmem:[%s6] sm:$0xff]
    %v543 = vld [vmem:[%s6 + $0x8] sm:$0xff]
    %v544 = vld [vmem:[%s6 + $0x10] sm:$0xff]
    %v545 = vld [vmem:[%s6 + $0x18] sm:$0xff]
    %v546 = vld [vmem:[%s6 + $0x20] sm:$0xff]
    %v547 = vld [vmem:[%s6 + $0x28] sm:$0xff]
    %v548 = vld [vmem:[%s6 + $0x30] sm:$0xff]
    %v549 = vld [vmem:[%s6 + $0x38] sm:$0xff]
    %v550 = vld [vmem:[%s6 + $0x40] sm:$0xff]
    %v551 = vld [vmem:[%s6 + $0x48] sm:$0xff]
    %v552 = vld [vmem:[%s6 + $0x50] sm:$0xff]
    %v553 = vld [vmem:[%s6 + $0x58] sm:$0xff]
    %v554 = vld [vmem:[%s6 + $0x60] sm:$0xff]
    %v555 = vld [vmem:[%s6 + $0x68] sm:$0xff]
    %v556 = vld [vmem:[%s6 + $0x70] sm:$0xff]
    %v557 = vld [vmem:[%s6 + $0x78] sm:$0xff]
    %559 = vset.pattern.permute.xlu0 0
    %560 = vperm.xlu0 %559, %v542
    %v561 = vpop.permute.xlu0 %560
    %564 = vset.pattern.permute.xlu0 0
    %565 = vperm.xlu0 %564, %v543
    %v566 = vpop.permute.xlu0 %565
    %569 = vset.pattern.permute.xlu0 0
    %570 = vperm.xlu0 %569, %v544
    %v571 = vpop.permute.xlu0 %570
    %574 = vset.pattern.permute.xlu0 0
    %575 = vperm.xlu0 %574, %v545
    %v576 = vpop.permute.xlu0 %575
    %579 = vset.pattern.permute.xlu0 0
    %580 = vperm.xlu0 %579, %v546
    %v581 = vpop.permute.xlu0 %580
    %584 = vset.pattern.permute.xlu0 0
    %585 = vperm.xlu0 %584, %v547
    %v586 = vpop.permute.xlu0 %585
    %589 = vset.pattern.permute.xlu0 0
    %590 = vperm.xlu0 %589, %v548
    %v591 = vpop.permute.xlu0 %590
    %594 = vset.pattern.permute.xlu0 0
    %595 = vperm.xlu0 %594, %v549
    %v596 = vpop.permute.xlu0 %595
    %599 = vset.pattern.permute.xlu0 0
    %600 = vperm.xlu0 %599, %v550
    %v601 = vpop.permute.xlu0 %600
    %604 = vset.pattern.permute.xlu0 0
    %605 = vperm.xlu0 %604, %v551
    %v606 = vpop.permute.xlu0 %605
    %609 = vset.pattern.permute.xlu0 0
    %610 = vperm.xlu0 %609, %v552
    %v611 = vpop.permute.xlu0 %610
    %614 = vset.pattern.permute.xlu0 0
    %615 = vperm.xlu0 %614, %v553
    %v616 = vpop.permute.xlu0 %615
    %619 = vset.pattern.permute.xlu0 0
    %620 = vperm.xlu0 %619, %v554
    %v621 = vpop.permute.xlu0 %620
    %624 = vset.pattern.permute.xlu0 0
    %625 = vperm.xlu0 %624, %v555
    %v626 = vpop.permute.xlu0 %625
    %629 = vset.pattern.permute.xlu0 0
    %630 = vperm.xlu0 %629, %v556
    %v631 = vpop.permute.xlu0 %630
    %634 = vset.pattern.permute.xlu0 0
    %635 = vperm.xlu0 %634, %v557
    %v636 = vpop.permute.xlu0 %635
    %v654 = vunpack.c.l.b16 %v518
    %v655 = vunpack.c.l.b16 %v519
    %v656 = vunpack.c.l.b16 %v520
    %v657 = vunpack.c.l.b16 %v521
    %v658 = vunpack.c.l.b16 %v522
    %v659 = vunpack.c.l.b16 %v523
    %v660 = vunpack.c.l.b16 %v524
    %v661 = vunpack.c.l.b16 %v525
    %v662 = vunpack.c.l.b16 %v526
    %v663 = vunpack.c.l.b16 %v527
    %v664 = vunpack.c.l.b16 %v528
    %v665 = vunpack.c.l.b16 %v529
    %v666 = vunpack.c.l.b16 %v530
    %v667 = vunpack.c.l.b16 %v531
    %v668 = vunpack.c.l.b16 %v532
    %v669 = vunpack.c.l.b16 %v533
    %v670 = vpack.c.b16 %v655, %v654
    %v671 = vpack.c.b16 %v657, %v656
    %v672 = vpack.c.b16 %v659, %v658
    %v673 = vpack.c.b16 %v661, %v660
    %v674 = vpack.c.b16 %v663, %v662
    %v675 = vpack.c.b16 %v665, %v664
    %v676 = vpack.c.b16 %v667, %v666
    %v677 = vpack.c.b16 %v669, %v668
    %686 = vmatpush.bf16.msra.mxu0 %v541
    %687 = vmatpush.bf16.msra.mxu0 %v540
    %688 = vmatpush.bf16.msra.mxu0 %v539
    %689 = vmatpush.bf16.msra.mxu0 %v538
    %690 = vmatpush.bf16.msra.mxu0 %v537
    %691 = vmatpush.bf16.msra.mxu0 %v536
    %692 = vmatpush.bf16.msra.mxu0 %v535
    %693 = vmatpush.bf16.msra.mxu0 %v534
    %694 = vmatmul.bf16.gmra.mxu0 %v670
    %v695 = vpop.f32.mrf.mxu0
    %v696 = vadd.f32 %v561, %v695
    %v697 = vpop.f32.mrf.mxu0
    %v698 = vadd.f32 %v566, %v697
    %699 = vmatmul.bf16.gmra.mxu0 %v671
    %v700 = vpop.f32.mrf.mxu0
    %v701 = vadd.f32 %v571, %v700
    %v702 = vpop.f32.mrf.mxu0
    %v703 = vadd.f32 %v576, %v702
    %704 = vmatmul.bf16.gmra.mxu0 %v672
    %v705 = vpop.f32.mrf.mxu0
    %v706 = vadd.f32 %v581, %v705
    %v707 = vpop.f32.mrf.mxu0
    %v708 = vadd.f32 %v586, %v707
    %709 = vmatmul.bf16.gmra.mxu0 %v673
    %v710 = vpop.f32.mrf.mxu0
    %v711 = vadd.f32 %v591, %v710
    %v712 = vpop.f32.mrf.mxu0
    %v713 = vadd.f32 %v596, %v712
    %714 = vmatmul.bf16.gmra.mxu0 %v674
    %v715 = vpop.f32.mrf.mxu0
    %v716 = vadd.f32 %v601, %v715
    %v717 = vpop.f32.mrf.mxu0
    %v718 = vadd.f32 %v606, %v717
    %719 = vmatmul.bf16.gmra.mxu0 %v675
    %v720 = vpop.f32.mrf.mxu0
    %v721 = vadd.f32 %v611, %v720
    %v722 = vpop.f32.mrf.mxu0
    %v723 = vadd.f32 %v616, %v722
    %724 = vmatmul.bf16.gmra.mxu0 %v676
    %v725 = vpop.f32.mrf.mxu0
    %v726 = vadd.f32 %v621, %v725
    %v727 = vpop.f32.mrf.mxu0
    %v728 = vadd.f32 %v626, %v727
    %729 = vmatmul.bf16.gmra.mxu0 %v677
    %v730 = vpop.f32.mrf.mxu0
    %v731 = vadd.f32 %v631, %v730
    %v732 = vpop.f32.mrf.mxu0
    %v733 = vadd.f32 %v636, %v732
    %734 = vdwg.mxu0
    %v735 = vtanh.pop %v696
    %v736 = vtanh.pop %v698
    %v737 = vtanh.pop %v701
    %v738 = vtanh.pop %v703
    %v739 = vtanh.pop %v706
    %v740 = vtanh.pop %v708
    %v741 = vtanh.pop %v711
    %v742 = vtanh.pop %v713
    %v743 = vtanh.pop %v716
    %v744 = vtanh.pop %v718
    %v745 = vtanh.pop %v721
    %v746 = vtanh.pop %v723
    %v747 = vtanh.pop %v726
    %v748 = vtanh.pop %v728
    %v749 = vtanh.pop %v731
    %v750 = vtanh.pop %v733
    %v751 = vld [vmem:[%s7] sm:$0xf]
    %v752 = vld [vmem:[%s7 + $0x4] sm:$0xf]
    %v753 = vld [vmem:[%s7 + $0x8] sm:$0xf]
    %v754 = vld [vmem:[%s7 + $0xc] sm:$0xf]
    %v755 = vld [vmem:[%s7 + $0x10] sm:$0xf]
    %v756 = vld [vmem:[%s7 + $0x14] sm:$0xf]
    %v757 = vld [vmem:[%s7 + $0x18] sm:$0xf]
    %v758 = vld [vmem:[%s7 + $0x1c] sm:$0xf]
    %v759 = vld [vmem:[%s7 + $0x20] sm:$0xf]
    %v760 = vld [vmem:[%s7 + $0x24] sm:$0xf]
    %v761 = vld [vmem:[%s7 + $0x28] sm:$0xf]
    %v762 = vld [vmem:[%s7 + $0x2c] sm:$0xf]
    %v763 = vld [vmem:[%s7 + $0x30] sm:$0xf]
    %v764 = vld [vmem:[%s7 + $0x34] sm:$0xf]
    %v765 = vld [vmem:[%s7 + $0x38] sm:$0xf]
    %v766 = vld [vmem:[%s7 + $0x3c] sm:$0xf]
    %v767 = vpack.c.bf16 %v736, %v735
    %v768 = vpack.c.bf16 %v738, %v737
    %v769 = vpack.c.bf16 %v740, %v739
    %v770 = vpack.c.bf16 %v742, %v741
    %v771 = vpack.c.bf16 %v744, %v743
    %v772 = vpack.c.bf16 %v746, %v745
    %v773 = vpack.c.bf16 %v748, %v747
    %v774 = vpack.c.bf16 %v750, %v749
    %v775 = vld [vmem:[%s8] sm:$0xff]
    %v776 = vld [vmem:[%s8 + $0x8] sm:$0xff]
    %v777 = vld [vmem:[%s8 + $0x10] sm:$0xff]
    %v778 = vld [vmem:[%s8 + $0x18] sm:$0xff]
    %v779 = vld [vmem:[%s8 + $0x20] sm:$0xff]
    %v780 = vld [vmem:[%s8 + $0x28] sm:$0xff]
    %v781 = vld [vmem:[%s8 + $0x30] sm:$0xff]
    %v782 = vld [vmem:[%s8 + $0x38] sm:$0xff]
    %v783 = vld [vmem:[%s8 + $0x40] sm:$0xff]
    %v784 = vld [vmem:[%s8 + $0x48] sm:$0xff]
    %v785 = vld [vmem:[%s8 + $0x50] sm:$0xff]
    %v786 = vld [vmem:[%s8 + $0x58] sm:$0xff]
    %v787 = vld [vmem:[%s8 + $0x60] sm:$0xff]
    %v788 = vld [vmem:[%s8 + $0x68] sm:$0xff]
    %v789 = vld [vmem:[%s8 + $0x70] sm:$0xff]
    %v790 = vld [vmem:[%s8 + $0x78] sm:$0xff]
    %792 = vset.pattern.permute.xlu0 0
    %793 = vperm.xlu0 %792, %v775
    %v794 = vpop.permute.xlu0 %793
    %797 = vset.pattern.permute.xlu0 0
    %798 = vperm.xlu0 %797, %v776
    %v799 = vpop.permute.xlu0 %798
    %802 = vset.pattern.permute.xlu0 0
    %803 = vperm.xlu0 %802, %v777
    %v804 = vpop.permute.xlu0 %803
    %807 = vset.pattern.permute.xlu0 0
    %808 = vperm.xlu0 %807, %v778
    %v809 = vpop.permute.xlu0 %808
    %812 = vset.pattern.permute.xlu0 0
    %813 = vperm.xlu0 %812, %v779
    %v814 = vpop.permute.xlu0 %813
    %817 = vset.pattern.permute.xlu0 0
    %818 = vperm.xlu0 %817, %v780
    %v819 = vpop.permute.xlu0 %818
    %822 = vset.pattern.permute.xlu0 0
    %823 = vperm.xlu0 %822, %v781
    %v824 = vpop.permute.xlu0 %823
    %827 = vset.pattern.permute.xlu0 0
    %828 = vperm.xlu0 %827, %v782
    %v829 = vpop.permute.xlu0 %828
    %832 = vset.pattern.permute.xlu0 0
    %833 = vperm.xlu0 %832, %v783
    %v834 = vpop.permute.xlu0 %833
    %837 = vset.pattern.permute.xlu0 0
    %838 = vperm.xlu0 %837, %v784
    %v839 = vpop.permute.xlu0 %838
    %842 = vset.pattern.permute.xlu0 0
    %843 = vperm.xlu0 %842, %v785
    %v844 = vpop.permute.xlu0 %843
    %847 = vset.pattern.permute.xlu0 0
    %848 = vperm.xlu0 %847, %v786
    %v849 = vpop.permute.xlu0 %848
    %852 = vset.pattern.permute.xlu0 0
    %853 = vperm.xlu0 %852, %v787
    %v854 = vpop.permute.xlu0 %853
    %857 = vset.pattern.permute.xlu0 0
    %858 = vperm.xlu0 %857, %v788
    %v859 = vpop.permute.xlu0 %858
    %862 = vset.pattern.permute.xlu0 0
    %863 = vperm.xlu0 %862, %v789
    %v864 = vpop.permute.xlu0 %863
    %867 = vset.pattern.permute.xlu0 0
    %868 = vperm.xlu0 %867, %v790
    %v869 = vpop.permute.xlu0 %868
    %v887 = vunpack.c.l.b16 %v751
    %v888 = vunpack.c.l.b16 %v752
    %v889 = vunpack.c.l.b16 %v753
    %v890 = vunpack.c.l.b16 %v754
    %v891 = vunpack.c.l.b16 %v755
    %v892 = vunpack.c.l.b16 %v756
    %v893 = vunpack.c.l.b16 %v757
    %v894 = vunpack.c.l.b16 %v758
    %v895 = vunpack.c.l.b16 %v759
    %v896 = vunpack.c.l.b16 %v760
    %v897 = vunpack.c.l.b16 %v761
    %v898 = vunpack.c.l.b16 %v762
    %v899 = vunpack.c.l.b16 %v763
    %v900 = vunpack.c.l.b16 %v764
    %v901 = vunpack.c.l.b16 %v765
    %v902 = vunpack.c.l.b16 %v766
    %v903 = vpack.c.b16 %v888, %v887
    %v904 = vpack.c.b16 %v890, %v889
    %v905 = vpack.c.b16 %v892, %v891
    %v906 = vpack.c.b16 %v894, %v893
    %v907 = vpack.c.b16 %v896, %v895
    %v908 = vpack.c.b16 %v898, %v897
    %v909 = vpack.c.b16 %v900, %v899
    %v910 = vpack.c.b16 %v902, %v901
    %919 = vmatpush.bf16.msra.mxu0 %v774
    %920 = vmatpush.bf16.msra.mxu0 %v773
    %921 = vmatpush.bf16.msra.mxu0 %v772
    %922 = vmatpush.bf16.msra.mxu0 %v771
    %923 = vmatpush.bf16.msra.mxu0 %v770
    %924 = vmatpush.bf16.msra.mxu0 %v769
    %925 = vmatpush.bf16.msra.mxu0 %v768
    %926 = vmatpush.bf16.msra.mxu0 %v767
    %927 = vmatmul.bf16.gmra.mxu0 %v903
    %v928 = vpop.f32.mrf.mxu0
    %v929 = vadd.f32 %v794, %v928
    %v930 = vpop.f32.mrf.mxu0
    %v931 = vadd.f32 %v799, %v930
    %932 = vmatmul.bf16.gmra.mxu0 %v904
    %v933 = vpop.f32.mrf.mxu0
    %v934 = vadd.f32 %v804, %v933
    %v935 = vpop.f32.mrf.mxu0
    %v936 = vadd.f32 %v809, %v935
    %937 = vmatmul.bf16.gmra.mxu0 %v905
    %v938 = vpop.f32.mrf.mxu0
    %v939 = vadd.f32 %v814, %v938
    %v940 = vpop.f32.mrf.mxu0
    %v941 = vadd.f32 %v819, %v940
    %942 = vmatmul.bf16.gmra.mxu0 %v906
    %v943 = vpop.f32.mrf.mxu0
    %v944 = vadd.f32 %v824, %v943
    %v945 = vpop.f32.mrf.mxu0
    %v946 = vadd.f32 %v829, %v945
    %947 = vmatmul.bf16.gmra.mxu0 %v907
    %v948 = vpop.f32.mrf.mxu0
    %v949 = vadd.f32 %v834, %v948
    %v950 = vpop.f32.mrf.mxu0
    %v951 = vadd.f32 %v839, %v950
    %952 = vmatmul.bf16.gmra.mxu0 %v908
    %v953 = vpop.f32.mrf.mxu0
    %v954 = vadd.f32 %v844, %v953
    %v955 = vpop.f32.mrf.mxu0
    %v956 = vadd.f32 %v849, %v955
    %957 = vmatmul.bf16.gmra.mxu0 %v909
    %v958 = vpop.f32.mrf.mxu0
    %v959 = vadd.f32 %v854, %v958
    %v960 = vpop.f32.mrf.mxu0
    %v961 = vadd.f32 %v859, %v960
    %962 = vmatmul.bf16.gmra.mxu0 %v910
    %v963 = vpop.f32.mrf.mxu0
    %v964 = vadd.f32 %v864, %v963
    %v965 = vpop.f32.mrf.mxu0
    %v966 = vadd.f32 %v869, %v965
    %967 = vdwg.mxu0
    %v968 = vtanh.pop %v929
    %v969 = vtanh.pop %v931
    %v970 = vtanh.pop %v934
    %v971 = vtanh.pop %v936
    %v972 = vtanh.pop %v939
    %v973 = vtanh.pop %v941
    %v974 = vtanh.pop %v944
    %v975 = vtanh.pop %v946
    %v976 = vtanh.pop %v949
    %v977 = vtanh.pop %v951
    %v978 = vtanh.pop %v954
    %v979 = vtanh.pop %v956
    %v980 = vtanh.pop %v959
    %v981 = vtanh.pop %v961
    %v982 = vtanh.pop %v964
    %v983 = vtanh.pop %v966
    %v984 = vld [vmem:[%s9] sm:$0xff]
    %v985 = vld [vmem:[%s9 + $0x8] sm:$0xff]
    %v986 = vld [vmem:[%s9 + $0x10] sm:$0xff]
    %v987 = vld [vmem:[%s9 + $0x18] sm:$0xff]
    %v988 = vld [vmem:[%s9 + $0x20] sm:$0xff]
    %v989 = vld [vmem:[%s9 + $0x28] sm:$0xff]
    %v990 = vld [vmem:[%s9 + $0x30] sm:$0xff]
    %v991 = vld [vmem:[%s9 + $0x38] sm:$0xff]
    %v992 = vld [vmem:[%s9 + $0x40] sm:$0xff]
    %v993 = vld [vmem:[%s9 + $0x48] sm:$0xff]
    %v994 = vld [vmem:[%s9 + $0x50] sm:$0xff]
    %v995 = vld [vmem:[%s9 + $0x58] sm:$0xff]
    %v996 = vld [vmem:[%s9 + $0x60] sm:$0xff]
    %v997 = vld [vmem:[%s9 + $0x68] sm:$0xff]
    %v998 = vld [vmem:[%s9 + $0x70] sm:$0xff]
    %v999 = vld [vmem:[%s9 + $0x78] sm:$0xff]
    %1001 = vset.pattern.permute.xlu0 0
    %1002 = vperm.xlu0 %1001, %v984
    %v1003 = vpop.permute.xlu0 %1002
    %1006 = vset.pattern.permute.xlu0 0
    %1007 = vperm.xlu0 %1006, %v985
    %v1008 = vpop.permute.xlu0 %1007
    %1011 = vset.pattern.permute.xlu0 0
    %1012 = vperm.xlu0 %1011, %v986
    %v1013 = vpop.permute.xlu0 %1012
    %1016 = vset.pattern.permute.xlu0 0
    %1017 = vperm.xlu0 %1016, %v987
    %v1018 = vpop.permute.xlu0 %1017
    %1021 = vset.pattern.permute.xlu0 0
    %1022 = vperm.xlu0 %1021, %v988
    %v1023 = vpop.permute.xlu0 %1022
    %1026 = vset.pattern.permute.xlu0 0
    %1027 = vperm.xlu0 %1026, %v989
    %v1028 = vpop.permute.xlu0 %1027
    %1031 = vset.pattern.permute.xlu0 0
    %1032 = vperm.xlu0 %1031, %v990
    %v1033 = vpop.permute.xlu0 %1032
    %1036 = vset.pattern.permute.xlu0 0
    %1037 = vperm.xlu0 %1036, %v991
    %v1038 = vpop.permute.xlu0 %1037
    %1041 = vset.pattern.permute.xlu0 0
    %1042 = vperm.xlu0 %1041, %v992
    %v1043 = vpop.permute.xlu0 %1042
    %1046 = vset.pattern.permute.xlu0 0
    %1047 = vperm.xlu0 %1046, %v993
    %v1048 = vpop.permute.xlu0 %1047
    %1051 = vset.pattern.permute.xlu0 0
    %1052 = vperm.xlu0 %1051, %v994
    %v1053 = vpop.permute.xlu0 %1052
    %1056 = vset.pattern.permute.xlu0 0
    %1057 = vperm.xlu0 %1056, %v995
    %v1058 = vpop.permute.xlu0 %1057
    %1061 = vset.pattern.permute.xlu0 0
    %1062 = vperm.xlu0 %1061, %v996
    %v1063 = vpop.permute.xlu0 %1062
    %1066 = vset.pattern.permute.xlu0 0
    %1067 = vperm.xlu0 %1066, %v997
    %v1068 = vpop.permute.xlu0 %1067
    %1071 = vset.pattern.permute.xlu0 0
    %1072 = vperm.xlu0 %1071, %v998
    %v1073 = vpop.permute.xlu0 %1072
    %1076 = vset.pattern.permute.xlu0 0
    %1077 = vperm.xlu0 %1076, %v999
    %v1078 = vpop.permute.xlu0 %1077
    %v1080 = vmul.f32 %v968, %v1003
    %v1081 = vmul.f32 %v969, %v1008
    %v1082 = vmul.f32 %v970, %v1013
    %v1083 = vmul.f32 %v971, %v1018
    %v1084 = vmul.f32 %v972, %v1023
    %v1085 = vmul.f32 %v973, %v1028
    %v1086 = vmul.f32 %v974, %v1033
    %v1087 = vmul.f32 %v975, %v1038
    %v1088 = vmul.f32 %v976, %v1043
    %v1089 = vmul.f32 %v977, %v1048
    %v1090 = vmul.f32 %v978, %v1053
    %v1091 = vmul.f32 %v979, %v1058
    %v1092 = vmul.f32 %v980, %v1063
    %v1093 = vmul.f32 %v981, %v1068
    %v1094 = vmul.f32 %v982, %v1073
    %v1095 = vmul.f32 %v983, %v1078
    %v1096 = vadd.f32 %v1080, %v1081
    %v1097 = vadd.f32 %v1096, %v1082
    %v1098 = vadd.f32 %v1097, %v1083
    %v1099 = vadd.f32 %v1098, %v1084
    %v1100 = vadd.f32 %v1099, %v1085
    %v1101 = vadd.f32 %v1100, %v1086
    %v1102 = vadd.f32 %v1101, %v1087
    %v1103 = vadd.f32 %v1102, %v1088
    %v1104 = vadd.f32 %v1103, %v1089
    %v1105 = vadd.f32 %v1104, %v1090
    %v1106 = vadd.f32 %v1105, %v1091
    %v1107 = vadd.f32 %v1106, %v1092
    %v1108 = vadd.f32 %v1107, %v1093
    %v1109 = vadd.f32 %v1108, %v1094
    %v1110 = vadd.f32 %v1109, %v1095
    %v1111 = vrot.slane %v1110, 4
    %v1112 = vadd.f32 %v1110, %v1111
    %v1113 = vrot.slane %v1112, 2
    %v1114 = vadd.f32 %v1112, %v1113
    %v1115 = vrot.slane %v1114, 1
    %v1116 = vadd.f32 %v1114, %v1115
    %v1117 = vld [vmem:[#allocation2] sm:$0x1]
    %1119 = vset.pattern.permute.xlu0 0
    %1120 = vperm.xlu0 %1119, %v1117
    %v1121 = vpop.permute.xlu0 %1120
    %v1123 = vperm.slane %v1121, 0
    %v1124 = vadd.f32 %v1116, %v1123
    %1125 = vst [vmem:[#allocation3] sm:$0x1] %v1124
    // Predicated region
    $region46: #{_forward_padded.1} parent=1 // pred_check
      _
    $region47: #{_forward_padded.1} parent=1 // pred_check_branch
      %1127 = sbr.rel (0) target = $region49
    $region48: #{_forward_padded.1} parent=1 // pred_region
      %1129 = vsyncadd [#allocation4], 0
      %s1131 = sshll.u32 [#allocation3], 4
      %s1132 = int_to_ptr.vmem [resolvable:$true] %s1131
      %s1133 = sshll.u32 %s11, 4
      %s1134 = int_to_ptr.hbm [resolvable:$true] %s1133
      %1136 = dma.vmem_to_hbm [thread:$0]  %s1132, 16, %s1134, [#allocation4]
    $region49: #{_forward_padded.1} parent=1 // pred_fallthru
      _
    // Predicated region
    $region50: #{_forward_padded.1} parent=1 // pred_check
      _
    $region51: #{_forward_padded.1} parent=1 // pred_check_branch
      %1138 = sbr.rel (0) target = $region53
    $region52: #{_forward_padded.1} parent=1 // pred_region
      %1140 = dma.done [#allocation4], 16
    $region53: #{_forward_padded.1} parent=1 // pred_fallthru
      _
    %1141 = vsyncpa [#allocation4], 1

</llo_original>
